<compile_context>
chip_gen: v7x
topology: tpu7x:2x2x1
jax: 0.10.0
libtpu: 0.0.40
codegen_flags: <defaults>
</compile_context>

<pallas_src>
import functools

import jax
import jax.numpy as jnp
from jax.experimental import pallas as pl
from jax.experimental.pallas import tpu as pltpu

BN_EPS = 1e-5

# ----------------------------- sizing helpers --------------------------------

_VMEM_CACHE = None


def _vmem_budget():
    """(vmem_limit_bytes for the compiler, byte budget for tile picking)."""
    global _VMEM_CACHE
    if _VMEM_CACHE is None:
        cap = 64 * 1024 * 1024
        try:
            info = pltpu.get_tpu_info()
            c = getattr(info, "vmem_capacity_bytes", None)
            if c:
                cap = int(c)
        except Exception:
            pass
        limit = min(cap * 3 // 4, 100 * 1024 * 1024)   # 96 MiB on 128-MiB parts, 48 MiB on v7x
        _VMEM_CACHE = (int(limit), int(limit * 0.85))  # headroom for compiler scratch
    return _VMEM_CACHE


def _pad_to_128(d):
    return ((d + 127) // 128) * 128


def _pad2(a):
    r, c = a.shape
    return jnp.pad(a, ((0, _pad_to_128(r) - r), (0, _pad_to_128(c) - c)))


def _pad1(v):
    return jnp.pad(v, (0, _pad_to_128(v.shape[0]) - v.shape[0]))


def _choose_tiles(k_dim, f_dim, bytes_fn, budget):
    """Largest (tile_k, tile_f), multiples of 128 dividing the padded dims, that fit
    the VMEM budget. tile_k is maximized first (keeps x resident: constant block
    index -> x DMA'd from HBM once instead of once per feature tile)."""

    def cands(d):
        if d % 128 == 0:
            return [t for t in range(d, 0, -128) if d % t == 0]
        return [d]  # only reachable if a dim was not pre-padded

    k_c, f_c = cands(k_dim), cands(f_dim)
    for tk in k_c:
        for tf in f_c:
            if bytes_fn(tk, tf) <= budget:
                return tk, tf
    # TODO(synk): if even the smallest tiles blow the budget, batch-axis tiling is needed.
    return k_c[-1], f_c[-1]


# ----------------------------- kernels ----------------------------------------


def _fused_linear_bn_relu_kernel(x_ref, w_ref, gamma_ref, beta_ref, o_ref, acc_ref):
    """o = relu(batchnorm1d_train(x @ w)), bias-free (cancelled by BN mean-sub).

    grid = (feature_tiles, k_tiles); k (reduction) is the innermost axis.
    """
    k = pl.program_id(1)

    @pl.when(k == 0)
    def _():
        acc_ref[...] = jnp.zeros_like(acc_ref)

    acc_ref[...] += jnp.dot(x_ref[...], w_ref[...],
                            preferred_element_type=jnp.float32)

    @pl.when(k == pl.num_programs(1) - 1)
    def _():
        h = acc_ref[...]                              # (N, tile_f) f32
        inv_n = 1.0 / h.shape[0]
        mean = jnp.sum(h, axis=0, keepdims=True) * inv_n
        mean_sq = jnp.sum(h * h, axis=0, keepdims=True) * inv_n
        var = mean_sq - mean * mean                   # biased, single pass
        inv_std = jax.lax.rsqrt(var + BN_EPS)
        y = (h - mean) * inv_std * gamma_ref[...] + beta_ref[...]
        o_ref[...] = jnp.maximum(y, 0.0).astype(o_ref.dtype)


def _fused_hidden_and_output_kernel(x_ref, w1_ref, gamma_ref, beta_ref,
                                    w2_ref, o_ref, acc_ref):
    """Per hidden-tile partial of relu(batchnorm1d_train(x @ w1)) @ w2.

    grid = (hidden_tiles, k_tiles). Each hidden tile j writes its OWN output block
    (no cross-j accumulation inside the kernel), so j can be "parallel" and shard
    across v7x's 2 TensorCores. Partials are summed (+ bias) outside.
    """
    k = pl.program_id(1)

    @pl.when(k == 0)
    def _():
        acc_ref[...] = jnp.zeros_like(acc_ref)

    acc_ref[...] += jnp.dot(x_ref[...], w1_ref[...],
                            preferred_element_type=jnp.float32)

    @pl.when(k == pl.num_programs(1) - 1)
    def _():
        h = acc_ref[...]                              # (N, tile_h) f32
        inv_n = 1.0 / h.shape[0]
        mean = jnp.sum(h, axis=0, keepdims=True) * inv_n
        mean_sq = jnp.sum(h * h, axis=0, keepdims=True) * inv_n
        var = mean_sq - mean * mean
        inv_std = jax.lax.rsqrt(var + BN_EPS)
        y = (h - mean) * inv_std * gamma_ref[...] + beta_ref[...]
        a = jnp.maximum(y, 0.0).astype(w2_ref.dtype)  # bf16 into the MXU
        o_ref[0] = jnp.dot(a, w2_ref[...], preferred_element_type=jnp.float32)


def _linear_kernel(x_ref, w_ref, b_ref, o_ref):
    """o = x @ w + b; o (f32) is the resident accumulator across the k axis."""
    k = pl.program_id(1)

    @pl.when(k == 0)
    def _():
        o_ref[...] = jnp.broadcast_to(b_ref[...], o_ref.shape).astype(o_ref.dtype)

    o_ref[...] += jnp.dot(x_ref[...], w_ref[...],
                          preferred_element_type=jnp.float32)


# ----------------------------- pallas_call wrappers ---------------------------
# All operands arrive pre-transposed / pre-cast / pre-padded (done once at pack
# time for weights, once per forward inside jit for x).


def fused_linear_bn_relu(x_b16, wt, gamma, beta, budget, vmem_limit):
    """relu(batchnorm1d_train(x @ wt)); bf16 output, lane-dense (padded) width."""
    n, k_dim = x_b16.shape
    f_dim = wt.shape[1]

    def bytes_needed(tk, tf):
        return (2 * n * tk * 2            # x bf16, double buffered
                + 2 * tk * tf * 2         # w  bf16, double buffered
                + 2 * n * tf * 2          # out bf16, double buffered
                + n * tf * 4              # f32 accumulator scratch
                + 4 * 2 * tf * 4)         # gamma / beta

    tile_k, tile_f = _choose_tiles(k_dim, f_dim, bytes_needed, budget)
    grid = (f_dim // tile_f, k_dim // tile_k)

    return pl.pallas_call(
        _fused_linear_bn_relu_kernel,
        out_shape=jax.ShapeDtypeStruct((n, f_dim), jnp.bfloat16),
        grid=grid,
        in_specs=[
            pl.BlockSpec((n, tile_k), lambda j, k: (0, k)),        # x
            pl.BlockSpec((tile_k, tile_f), lambda j, k: (k, j)),   # w (in, out)
            pl.BlockSpec((1, tile_f), lambda j, k: (0, j)),        # gamma
            pl.BlockSpec((1, tile_f), lambda j, k: (0, j)),        # beta
        ],
        out_specs=pl.BlockSpec((n, tile_f), lambda j, k: (0, j)),
        scratch_shapes=[pltpu.VMEM((n, tile_f), jnp.float32)],
        compiler_params=pltpu.CompilerParams(
            dimension_semantics=("parallel", "arbitrary"),
            vmem_limit_bytes=vmem_limit),
    )(x_b16, wt, gamma, beta)


def fused_linear_bn_relu_then_linear(x_b16, w1t, gamma, beta, w2t, b2,
                                     budget, vmem_limit):
    """relu(batchnorm1d_train(x @ w1t)) @ w2t + b2 with one pallas_call.

    Returns (n, out_pad) f32; the per-hidden-tile partial sum + bias is a single
    cheap XLA op that fuses with the caller's final slice under jit.
    """
    n, k_dim = x_b16.shape
    h_dim = w1t.shape[1]
    out_pad = w2t.shape[1]

    def bytes_needed(tk, th):
        return (2 * n * tk * 2            # x bf16
                + 2 * tk * th * 2         # w1 bf16
                + 2 * th * out_pad * 2    # w2 bf16
                + 2 * n * out_pad * 4     # partial output f32
                + n * th * 4              # f32 accumulator scratch
                + 4 * 2 * th * 4)         # gamma / beta

    tile_k, tile_h = _choose_tiles(k_dim, h_dim, bytes_needed, budget)
    n_j = h_dim // tile_h
    grid = (n_j, k_dim // tile_k)

    partials = pl.pallas_call(
        _fused_hidden_and_output_kernel,
        out_shape=jax.ShapeDtypeStruct((n_j, n, out_pad), jnp.float32),
        grid=grid,
        in_specs=[
            pl.BlockSpec((n, tile_k), lambda j, k: (0, k)),          # x
            pl.BlockSpec((tile_k, tile_h), lambda j, k: (k, j)),     # w1 (in, hid)
            pl.BlockSpec((1, tile_h), lambda j, k: (0, j)),          # gamma
            pl.BlockSpec((1, tile_h), lambda j, k: (0, j)),          # beta
            pl.BlockSpec((tile_h, out_pad), lambda j, k: (j, 0)),    # w2 (hid, out)
        ],
        # Each hidden tile j owns a distinct output block -> j is safely "parallel".
        out_specs=pl.BlockSpec((1, n, out_pad), lambda j, k: (j, 0, 0)),
        scratch_shapes=[pltpu.VMEM((n, tile_h), jnp.float32)],
        compiler_params=pltpu.CompilerParams(
            dimension_semantics=("parallel", "arbitrary"),
            vmem_limit_bytes=vmem_limit),
    )(x_b16, w1t, gamma, beta, w2t)

    return jnp.sum(partials, axis=0) + b2


def linear(x_b16, wt, b, budget, vmem_limit):
    """Plain out = x @ wt + b (num_layers == 1 only). Returns (n, out_pad) f32."""
    n, k_dim = x_b16.shape
    f_dim = wt.shape[1]

    def bytes_needed(tk, tf):
        return 2 * n * tk * 2 + 2 * tk * tf * 2 + 2 * n * tf * 4 + 2 * tf * 4

    tile_k, tile_f = _choose_tiles(k_dim, f_dim, bytes_needed, budget)
    grid = (f_dim // tile_f, k_dim // tile_k)

    return pl.pallas_call(
        _linear_kernel,
        out_shape=jax.ShapeDtypeStruct((n, f_dim), jnp.float32),
        grid=grid,
        in_specs=[
            pl.BlockSpec((n, tile_k), lambda j, k: (0, k)),
            pl.BlockSpec((tile_k, tile_f), lambda j, k: (k, j)),
            pl.BlockSpec((1, tile_f), lambda j, k: (0, j)),
        ],
        out_specs=pl.BlockSpec((n, tile_f), lambda j, k: (0, j)),
        compiler_params=pltpu.CompilerParams(
            dimension_semantics=("parallel", "arbitrary"),
            vmem_limit_bytes=vmem_limit),
    )(x_b16, wt, b)


# ----------------------------- parameters ------------------------------------


def init_mlp_params(key, num_layers, input_dim, hidden_dim, output_dim):
    """Raw PyTorch-convention parameters (w: (out, in), b: (out,))."""
    if num_layers < 1:
        raise ValueError("number of layers should be positive!")

    def linear_init(key, fan_in, fan_out):
        kw, kb = jax.random.split(key)
        bound = 1.0 / (fan_in ** 0.5)
        w = jax.random.uniform(kw, (fan_out, fan_in), jnp.float32, -bound, bound)
        b = jax.random.uniform(kb, (fan_out,), jnp.float32, -bound, bound)
        return w, b

    params = {"linears": [], "bn": []}
    if num_layers == 1:
        params["linears"].append(linear_init(key, input_dim, output_dim))
        return params

    keys = jax.random.split(key, num_layers)
    dims = [input_dim] + [hidden_dim] * (num_layers - 1) + [output_dim]
    for i in range(num_layers):
        params["linears"].append(linear_init(keys[i], dims[i], dims[i + 1]))
    for _ in range(num_layers - 1):
        # BatchNorm1d default init: gamma=1, beta=0.
        params["bn"].append((jnp.ones((hidden_dim,), jnp.float32),
                             jnp.zeros((hidden_dim,), jnp.float32)))
    return params


def pack_params(raw):
    """One-time weight prep: transpose to (in, out), cast to bf16, zero-pad every
    dim to a multiple of 128. Hidden-layer linear biases are dropped (exactly
    cancelled by training-mode BN's batch-mean subtraction); padded lanes use
    gamma=beta=0 so the padded activations are exactly zero end-to-end."""
    linears, bns = raw["linears"], raw["bn"]
    num_layers = len(linears)
    packed = {"hidden": [], "final": None}

    if num_layers == 1:
        w, b = linears[0]
        packed["final"] = (_pad2(w.T.astype(jnp.bfloat16)),
                           _pad1(b).reshape(1, -1).astype(jnp.float32))
        return packed

    for i in range(num_layers - 1):
        w, _b = linears[i]                             # bias dropped (cancelled by BN)
        gamma, beta = bns[i]
        packed["hidden"].append((_pad2(w.T.astype(jnp.bfloat16)),
                                 _pad1(gamma).reshape(1, -1).astype(jnp.float32),
                                 _pad1(beta).reshape(1, -1).astype(jnp.float32)))
    w, b = linears[-1]
    packed["final"] = (_pad2(w.T.astype(jnp.bfloat16)),
                       _pad1(b).reshape(1, -1).astype(jnp.float32))
    return packed


# ----------------------------- forward ----------------------------------------


@functools.partial(jax.jit, static_argnames=("output_dim",))
def mlp_apply(packed, x, *, output_dim):
    vmem_limit, budget = _vmem_budget()
    hidden = packed["hidden"]
    wt_f, b_f = packed["final"]

    in_pad = (hidden[0][0] if hidden else wt_f).shape[0]
    n, in_dim = x.shape
    if in_dim != in_pad:
        x = jnp.pad(x, ((0, 0), (0, in_pad - in_dim)))
    h = x.astype(jnp.bfloat16)

    if not hidden:                                     # num_layers == 1
        out = linear(h, wt_f, b_f, budget, vmem_limit)
        return out[:, :output_dim]

    for wt, g, bt in hidden[:-1]:
        h = fused_linear_bn_relu(h, wt, g, bt, budget, vmem_limit)

    # Last hidden layer fused with the output linear (saves an HBM round trip).
    w1t, g, bt = hidden[-1]
    out = fused_linear_bn_relu_then_linear(h, w1t, g, bt, wt_f, b_f,
                                           budget, vmem_limit)
    return out[:, :output_dim]


# ----------------------------- references ------------------------------------


def mlp_reference(raw, x):
    """Pure-JAX reference mirroring the kernels' numerics (bf16 matmul inputs,
    f32 accumulation, f32 training-mode BN with biased variance, biases kept)."""

    def mm(a, w):  # w in PyTorch (out, in) convention
        return jnp.dot(a.astype(jnp.bfloat16), w.T.astype(jnp.bfloat16),
                       preferred_element_type=jnp.float32)

    linears, bns = raw["linears"], raw["bn"]
    num_layers = len(linears)
    if num_layers == 1:
        w, b = linears[0]
        return mm(x, w) + b
    h = x
    for i in range(num_layers - 1):
        w, b = linears[i]
        gamma, beta = bns[i]
        z = mm(h, w) + b
        mean = z.mean(axis=0, keepdims=True)
        var = ((z - mean) ** 2).mean(axis=0, keepdims=True)
        h = jnp.maximum((z - mean) / jnp.sqrt(var + BN_EPS) * gamma + beta, 0.0)
    w, b = linears[-1]
    return mm(h, w) + b


def mlp_reference_f32(raw, x):
    """Full-precision reference (PyTorch-faithful fp32 semantics)."""
    linears, bns = raw["linears"], raw["bn"]
    num_layers = len(linears)
    if num_layers == 1:
        w, b = linears[0]
        return x @ w.T + b
    h = x
    for i in range(num_layers - 1):
        w, b = linears[i]
        gamma, beta = bns[i]
        z = h @ w.T + b
        mean = z.mean(axis=0, keepdims=True)
        var = ((z - mean) ** 2).mean(axis=0, keepdims=True)
        h = jnp.maximum((z - mean) / jnp.sqrt(var + BN_EPS) * gamma + beta, 0.0)
    w, b = linears[-1]
    return h @ w.T + b


# ----------------------------- main -------------------------------------------

if __name__ == "__main__":
    key = jax.random.PRNGKey(0)
    k_param, k_x = jax.random.split(key)

    num_layers, input_dim, hidden_dim, output_dim = 3, 16, 32, 8
    batch = 8

    raw = init_mlp_params(k_param, num_layers, input_dim, hidden_dim, output_dim)
    packed = pack_params(raw)
    x = jax.random.normal(k_x, (batch, input_dim), jnp.float32)

    out = jax.block_until_ready(mlp_apply(packed, x, output_dim=output_dim))
    ref = mlp_reference(raw, x)
    ref32 = mlp_reference_f32(raw, x)

    assert out.shape == (batch, output_dim)
    assert jnp.allclose(out, ref, atol=1e-3, rtol=1e-3), "mismatch vs mirrored reference"
    assert jnp.allclose(out, ref32, atol=1e-1, rtol=1e-1), "mismatch vs fp32 reference"

    # Extra coverage: num_layers == 1 (plain linear kernel) and == 2 (fused-final only).
    raw1 = init_mlp_params(k_param, 1, input_dim, hidden_dim, output_dim)
    o1 = jax.block_until_ready(mlp_apply(pack_params(raw1), x, output_dim=output_dim))
    assert jnp.allclose(o1, mlp_reference(raw1, x), atol=1e-3, rtol=1e-3)

    raw2 = init_mlp_params(k_param, 2, input_dim, hidden_dim, output_dim)
    o2 = jax.block_until_ready(mlp_apply(pack_params(raw2), x, output_dim=output_dim))
    assert jnp.allclose(o2, mlp_reference(raw2, x), atol=1e-3, rtol=1e-3)

    print("KERNEL_OK")
</pallas_src>

<mosaic_0001>
module attributes {stable_mosaic.version = 11 : i64} {
  func.func @_fused_linear_bn_relu_kernel(%arg0: i32, %arg1: i32, %arg2: memref<8x128xbf16, #tpu.memory_space<vmem>>, %arg3: memref<128x128xbf16, #tpu.memory_space<vmem>>, %arg4: memref<1x128xf32, #tpu.memory_space<vmem>>, %arg5: memref<1x128xf32, #tpu.memory_space<vmem>>, %arg6: memref<8x128xbf16, #tpu.memory_space<vmem>>, %arg7: memref<8x128xf32, #tpu.memory_space<vmem>>) attributes {dimension_semantics = [#tpu.dimension_semantics<parallel>, #tpu.dimension_semantics<arbitrary>], iteration_bounds = array<i64: 1, 1>, scalar_prefetch = 0 : i64, scratch_operands = 1 : i64, tpu.core_type = #tpu.core_type<tc>, window_params = [{transform_indices = @transform_0, window_bounds = array<i64: 8, 128>}, {transform_indices = @transform_1, window_bounds = array<i64: 128, 128>}, {transform_indices = @transform_2, window_bounds = array<i64: 1, 128>}, {transform_indices = @transform_3, window_bounds = array<i64: 1, 128>}, {transform_indices = @transform_4, window_bounds = array<i64: 8, 128>}]} {
    %c0_i32 = arith.constant 0 : i32
    %0 = arith.cmpi eq, %arg1, %c0_i32 : i32
    %1 = arith.extui %0 : i1 to i32
    %c0_i32_0 = arith.constant 0 : i32
    %2 = arith.cmpi ne, %1, %c0_i32_0 : i32
    scf.if %2 {
      %cst_10 = arith.constant 0.000000e+00 : f32
      %12 = vector.broadcast %cst_10 : f32 to vector<8x128xf32>
      %c0_11 = arith.constant 0 : index
      %c0_12 = arith.constant 0 : index
      %13 = vector.load %arg7[%c0_11, %c0_12] : memref<8x128xf32, #tpu.memory_space<vmem>>, vector<8x128xf32>
      tpu.vector_store %arg7[%c0_11, %c0_12], %12 {strides = array<i32>} : memref<8x128xf32, #tpu.memory_space<vmem>>, vector<8x128xf32>,
    } else {
    }
    %c0 = arith.constant 0 : index
    %c0_1 = arith.constant 0 : index
    %3 = vector.load %arg7[%c0, %c0_1] : memref<8x128xf32, #tpu.memory_space<vmem>>, vector<8x128xf32>
    %c0_2 = arith.constant 0 : index
    %c0_3 = arith.constant 0 : index
    %4 = vector.load %arg2[%c0_2, %c0_3] : memref<8x128xbf16, #tpu.memory_space<vmem>>, vector<8x128xbf16>
    %c0_4 = arith.constant 0 : index
    %c0_5 = arith.constant 0 : index
    %5 = vector.load %arg3[%c0_4, %c0_5] : memref<128x128xbf16, #tpu.memory_space<vmem>>, vector<128x128xbf16>
    %cst = arith.constant dense<0.000000e+00> : vector<8x128xf32>
    %6 = tpu.matmul %4, %5, %cst {dimension_numbers = #tpu.dot_dimension_numbers<[1], [0], [0], [1], [0, 0, 1, 1], [], []>} : vector<8x128xbf16>, vector<128x128xbf16>, vector<8x128xf32> -> vector<8x128xf32>
    %7 = arith.addf %3, %6 : vector<8x128xf32>
    %c0_6 = arith.constant 0 : index
    %c0_7 = arith.constant 0 : index
    %8 = vector.load %arg7[%c0_6, %c0_7] : memref<8x128xf32, #tpu.memory_space<vmem>>, vector<8x128xf32>
    tpu.vector_store %arg7[%c0_6, %c0_7], %7 {strides = array<i32>} : memref<8x128xf32, #tpu.memory_space<vmem>>, vector<8x128xf32>,
    %c0_i32_8 = arith.constant 0 : i32
    %9 = arith.cmpi eq, %arg1, %c0_i32_8 : i32
    %10 = arith.extui %9 : i1 to i32
    %c0_i32_9 = arith.constant 0 : i32
    %11 = arith.cmpi ne, %10, %c0_i32_9 : i32
    scf.if %11 {
      %c0_10 = arith.constant 0 : index
      %c0_11 = arith.constant 0 : index
      %12 = vector.load %arg7[%c0_10, %c0_11] : memref<8x128xf32, #tpu.memory_space<vmem>>, vector<8x128xf32>
      %cst_12 = arith.constant dense<0.000000e+00> : vector<128xf32>
      %13 = vector.multi_reduction <add>, %12, %cst_12 [0] : vector<8x128xf32> to vector<128xf32>
      %14 = vector.shape_cast %13 : vector<128xf32> to vector<1x128xf32>
      %cst_13 = arith.constant 1.250000e-01 : f32
      %15 = vector.broadcast %cst_13 : f32 to vector<1x128xf32>
      %16 = arith.mulf %14, %15 : vector<1x128xf32>
      %17 = arith.mulf %12, %12 : vector<8x128xf32>
      %cst_14 = arith.constant dense<0.000000e+00> : vector<128xf32>
      %18 = vector.multi_reduction <add>, %17, %cst_14 [0] : vector<8x128xf32> to vector<128xf32>
      %19 = vector.shape_cast %18 : vector<128xf32> to vector<1x128xf32>
      %cst_15 = arith.constant 1.250000e-01 : f32
      %20 = vector.broadcast %cst_15 : f32 to vector<1x128xf32>
      %21 = arith.mulf %19, %20 : vector<1x128xf32>
      %22 = arith.mulf %16, %16 : vector<1x128xf32>
      %23 = arith.subf %21, %22 : vector<1x128xf32>
      %cst_16 = arith.constant 9.99999974E-6 : f32
      %24 = vector.broadcast %cst_16 : f32 to vector<1x128xf32>
      %25 = arith.addf %23, %24 : vector<1x128xf32>
      %26 = math.rsqrt %25 : vector<1x128xf32>
      %27 = vector.broadcast %16 : vector<1x128xf32> to vector<8x128xf32>
      %28 = arith.subf %12, %27 : vector<8x128xf32>
      %29 = vector.broadcast %26 : vector<1x128xf32> to vector<8x128xf32>
      %30 = arith.mulf %28, %29 : vector<8x128xf32>
      %c0_17 = arith.constant 0 : index
      %c0_18 = arith.constant 0 : index
      %31 = vector.load %arg4[%c0_17, %c0_18] : memref<1x128xf32, #tpu.memory_space<vmem>>, vector<1x128xf32>
      %32 = vector.broadcast %31 : vector<1x128xf32> to vector<8x128xf32>
      %33 = arith.mulf %30, %32 : vector<8x128xf32>
      %c0_19 = arith.constant 0 : index
      %c0_20 = arith.constant 0 : index
      %34 = vector.load %arg5[%c0_19, %c0_20] : memref<1x128xf32, #tpu.memory_space<vmem>>, vector<1x128xf32>
      %35 = vector.broadcast %34 : vector<1x128xf32> to vector<8x128xf32>
      %36 = arith.addf %33, %35 : vector<8x128xf32>
      %cst_21 = arith.constant 0.000000e+00 : f32
      %37 = vector.broadcast %cst_21 : f32 to vector<8x128xf32>
      %38 = arith.maximumf %36, %37 : vector<8x128xf32>
      %39 = arith.truncf %38 : vector<8x128xf32> to vector<8x128xbf16>
      %c0_22 = arith.constant 0 : index
      %c0_23 = arith.constant 0 : index
      %40 = vector.load %arg6[%c0_22, %c0_23] : memref<8x128xbf16, #tpu.memory_space<vmem>>, vector<8x128xbf16>
      tpu.vector_store %arg6[%c0_22, %c0_23], %39 {strides = array<i32>} : memref<8x128xbf16, #tpu.memory_space<vmem>>, vector<8x128xbf16>,
    } else {
    }
    return
  }
  func.func @transform_0(%arg0: i32, %arg1: i32) -> (i32, i32) {
    %c0_i32 = arith.constant 0 : i32
    %c0_i32_0 = arith.constant 0 : i32
    return %c0_i32, %arg1 : i32, i32
  }
  func.func @transform_1(%arg0: i32, %arg1: i32) -> (i32, i32) {
    %c0_i32 = arith.constant 0 : i32
    return %arg1, %arg0 : i32, i32
  }
  func.func @transform_2(%arg0: i32, %arg1: i32) -> (i32, i32) {
    %c0_i32 = arith.constant 0 : i32
    %c0_i32_0 = arith.constant 0 : i32
    return %c0_i32, %arg0 : i32, i32
  }
  func.func @transform_3(%arg0: i32, %arg1: i32) -> (i32, i32) {
    %c0_i32 = arith.constant 0 : i32
    %c0_i32_0 = arith.constant 0 : i32
    return %c0_i32, %arg0 : i32, i32
  }
  func.func @transform_4(%arg0: i32, %arg1: i32) -> (i32, i32) {
    %c0_i32 = arith.constant 0 : i32
    %c0_i32_0 = arith.constant 0 : i32
    return %c0_i32, %arg0 : i32, i32
  }
}

module attributes {stable_mosaic.version = 11 : i64} {
  func.func @_fused_hidden_and_output_kernel(%arg0: i32, %arg1: i32, %arg2: memref<8x128xbf16, #tpu.memory_space<vmem>>, %arg3: memref<128x128xbf16, #tpu.memory_space<vmem>>, %arg4: memref<1x128xf32, #tpu.memory_space<vmem>>, %arg5: memref<1x128xf32, #tpu.memory_space<vmem>>, %arg6: memref<128x128xbf16, #tpu.memory_space<vmem>>, %arg7: memref<1x8x128xf32, #tpu.memory_space<vmem>>, %arg8: memref<8x128xf32, #tpu.memory_space<vmem>>) attributes {dimension_semantics = [#tpu.dimension_semantics<parallel>, #tpu.dimension_semantics<arbitrary>], iteration_bounds = array<i64: 1, 1>, scalar_prefetch = 0 : i64, scratch_operands = 1 : i64, tpu.core_type = #tpu.core_type<tc>, window_params = [{transform_indices = @transform_0, window_bounds = array<i64: 8, 128>}, {transform_indices = @transform_1, window_bounds = array<i64: 128, 128>}, {transform_indices = @transform_2, window_bounds = array<i64: 1, 128>}, {transform_indices = @transform_3, window_bounds = array<i64: 1, 128>}, {transform_indices = @transform_4, window_bounds = array<i64: 128, 128>}, {transform_indices = @transform_5, window_bounds = array<i64: 1, 8, 128>}]} {
    %c0_i32 = arith.constant 0 : i32
    %0 = arith.cmpi eq, %arg1, %c0_i32 : i32
    %1 = arith.extui %0 : i1 to i32
    %c0_i32_0 = arith.constant 0 : i32
    %2 = arith.cmpi ne, %1, %c0_i32_0 : i32
    scf.if %2 {
      %cst_10 = arith.constant 0.000000e+00 : f32
      %12 = vector.broadcast %cst_10 : f32 to vector<8x128xf32>
      %c0_11 = arith.constant 0 : index
      %c0_12 = arith.constant 0 : index
      %13 = vector.load %arg8[%c0_11, %c0_12] : memref<8x128xf32, #tpu.memory_space<vmem>>, vector<8x128xf32>
      tpu.vector_store %arg8[%c0_11, %c0_12], %12 {strides = array<i32>} : memref<8x128xf32, #tpu.memory_space<vmem>>, vector<8x128xf32>,
    } else {
    }
    %c0 = arith.constant 0 : index
    %c0_1 = arith.constant 0 : index
    %3 = vector.load %arg8[%c0, %c0_1] : memref<8x128xf32, #tpu.memory_space<vmem>>, vector<8x128xf32>
    %c0_2 = arith.constant 0 : index
    %c0_3 = arith.constant 0 : index
    %4 = vector.load %arg2[%c0_2, %c0_3] : memref<8x128xbf16, #tpu.memory_space<vmem>>, vector<8x128xbf16>
    %c0_4 = arith.constant 0 : index
    %c0_5 = arith.constant 0 : index
    %5 = vector.load %arg3[%c0_4, %c0_5] : memref<128x128xbf16, #tpu.memory_space<vmem>>, vector<128x128xbf16>
    %cst = arith.constant dense<0.000000e+00> : vector<8x128xf32>
    %6 = tpu.matmul %4, %5, %cst {dimension_numbers = #tpu.dot_dimension_numbers<[1], [0], [0], [1], [0, 0, 1, 1], [], []>} : vector<8x128xbf16>, vector<128x128xbf16>, vector<8x128xf32> -> vector<8x128xf32>
    %7 = arith.addf %3, %6 : vector<8x128xf32>
    %c0_6 = arith.constant 0 : index
    %c0_7 = arith.constant 0 : index
    %8 = vector.load %arg8[%c0_6, %c0_7] : memref<8x128xf32, #tpu.memory_space<vmem>>, vector<8x128xf32>
    tpu.vector_store %arg8[%c0_6, %c0_7], %7 {strides = array<i32>} : memref<8x128xf32, #tpu.memory_space<vmem>>, vector<8x128xf32>,
    %c0_i32_8 = arith.constant 0 : i32
    %9 = arith.cmpi eq, %arg1, %c0_i32_8 : i32
    %10 = arith.extui %9 : i1 to i32
    %c0_i32_9 = arith.constant 0 : i32
    %11 = arith.cmpi ne, %10, %c0_i32_9 : i32
    scf.if %11 {
      %c0_10 = arith.constant 0 : index
      %c0_11 = arith.constant 0 : index
      %12 = vector.load %arg8[%c0_10, %c0_11] : memref<8x128xf32, #tpu.memory_space<vmem>>, vector<8x128xf32>
      %cst_12 = arith.constant dense<0.000000e+00> : vector<128xf32>
      %13 = vector.multi_reduction <add>, %12, %cst_12 [0] : vector<8x128xf32> to vector<128xf32>
      %14 = vector.shape_cast %13 : vector<128xf32> to vector<1x128xf32>
      %cst_13 = arith.constant 1.250000e-01 : f32
      %15 = vector.broadcast %cst_13 : f32 to vector<1x128xf32>
      %16 = arith.mulf %14, %15 : vector<1x128xf32>
      %17 = arith.mulf %12, %12 : vector<8x128xf32>
      %cst_14 = arith.constant dense<0.000000e+00> : vector<128xf32>
      %18 = vector.multi_reduction <add>, %17, %cst_14 [0] : vector<8x128xf32> to vector<128xf32>
      %19 = vector.shape_cast %18 : vector<128xf32> to vector<1x128xf32>
      %cst_15 = arith.constant 1.250000e-01 : f32
      %20 = vector.broadcast %cst_15 : f32 to vector<1x128xf32>
      %21 = arith.mulf %19, %20 : vector<1x128xf32>
      %22 = arith.mulf %16, %16 : vector<1x128xf32>
      %23 = arith.subf %21, %22 : vector<1x128xf32>
      %cst_16 = arith.constant 9.99999974E-6 : f32
      %24 = vector.broadcast %cst_16 : f32 to vector<1x128xf32>
      %25 = arith.addf %23, %24 : vector<1x128xf32>
      %26 = math.rsqrt %25 : vector<1x128xf32>
      %27 = vector.broadcast %16 : vector<1x128xf32> to vector<8x128xf32>
      %28 = arith.subf %12, %27 : vector<8x128xf32>
      %29 = vector.broadcast %26 : vector<1x128xf32> to vector<8x128xf32>
      %30 = arith.mulf %28, %29 : vector<8x128xf32>
      %c0_17 = arith.constant 0 : index
      %c0_18 = arith.constant 0 : index
      %31 = vector.load %arg4[%c0_17, %c0_18] : memref<1x128xf32, #tpu.memory_space<vmem>>, vector<1x128xf32>
      %32 = vector.broadcast %31 : vector<1x128xf32> to vector<8x128xf32>
      %33 = arith.mulf %30, %32 : vector<8x128xf32>
      %c0_19 = arith.constant 0 : index
      %c0_20 = arith.constant 0 : index
      %34 = vector.load %arg5[%c0_19, %c0_20] : memref<1x128xf32, #tpu.memory_space<vmem>>, vector<1x128xf32>
      %35 = vector.broadcast %34 : vector<1x128xf32> to vector<8x128xf32>
      %36 = arith.addf %33, %35 : vector<8x128xf32>
      %cst_21 = arith.constant 0.000000e+00 : f32
      %37 = vector.broadcast %cst_21 : f32 to vector<8x128xf32>
      %38 = arith.maximumf %36, %37 : vector<8x128xf32>
      %39 = arith.truncf %38 : vector<8x128xf32> to vector<8x128xbf16>
      %c0_22 = arith.constant 0 : index
      %c0_23 = arith.constant 0 : index
      %40 = vector.load %arg6[%c0_22, %c0_23] : memref<128x128xbf16, #tpu.memory_space<vmem>>, vector<128x128xbf16>
      %cst_24 = arith.constant dense<0.000000e+00> : vector<8x128xf32>
      %41 = tpu.matmul %39, %40, %cst_24 {dimension_numbers = #tpu.dot_dimension_numbers<[1], [0], [0], [1], [0, 0, 1, 1], [], []>} : vector<8x128xbf16>, vector<128x128xbf16>, vector<8x128xf32> -> vector<8x128xf32>
      %c0_25 = arith.constant 0 : index
      %c0_26 = arith.constant 0 : index
      %c0_27 = arith.constant 0 : index
      %42 = vector.load %arg7[%c0_25, %c0_26, %c0_27] : memref<1x8x128xf32, #tpu.memory_space<vmem>>, vector<1x8x128xf32>
      %43 = vector.shape_cast %42 : vector<1x8x128xf32> to vector<8x128xf32>
      %44 = vector.shape_cast %41 : vector<8x128xf32> to vector<1x8x128xf32>
      tpu.vector_store %arg7[%c0_25, %c0_26, %c0_27], %44 {strides = array<i32>} : memref<1x8x128xf32, #tpu.memory_space<vmem>>, vector<1x8x128xf32>,
    } else {
    }
    return
  }
  func.func @transform_0(%arg0: i32, %arg1: i32) -> (i32, i32) {
    %c0_i32 = arith.constant 0 : i32
    %c0_i32_0 = arith.constant 0 : i32
    return %c0_i32, %arg1 : i32, i32
  }
  func.func @transform_1(%arg0: i32, %arg1: i32) -> (i32, i32) {
    %c0_i32 = arith.constant 0 : i32
    return %arg1, %arg0 : i32, i32
  }
  func.func @transform_2(%arg0: i32, %arg1: i32) -> (i32, i32) {
    %c0_i32 = arith.constant 0 : i32
    %c0_i32_0 = arith.constant 0 : i32
    return %c0_i32, %arg0 : i32, i32
  }
  func.func @transform_3(%arg0: i32, %arg1: i32) -> (i32, i32) {
    %c0_i32 = arith.constant 0 : i32
    %c0_i32_0 = arith.constant 0 : i32
    return %c0_i32, %arg0 : i32, i32
  }
  func.func @transform_4(%arg0: i32, %arg1: i32) -> (i32, i32) {
    %c0_i32 = arith.constant 0 : i32
    %c0_i32_0 = arith.constant 0 : i32
    return %arg0, %c0_i32 : i32, i32
  }
  func.func @transform_5(%arg0: i32, %arg1: i32) -> (i32, i32, i32) {
    %c0_i32 = arith.constant 0 : i32
    %c0_i32_0 = arith.constant 0 : i32
    %c0_i32_1 = arith.constant 0 : i32
    return %arg0, %c0_i32, %c0_i32_0 : i32, i32, i32
  }
}

</mosaic_0001>

<llo_original>
// kernel: mlp_apply.2
$region0: #{mlp_apply.2}
  #allocation0 [shape = 'u32[]', space=smem, size = 0x4, offset = 0x4, fixed_abs, tag = 'smem constant byte address 0x4 - core index']
  #allocation1 [shape = 'u32[144,128]{1,0:T(1,128)}', space=vmem, size = 0x12000, scoped, tag = 'internal scratch']
  #allocation2 [shape = 'f32[8,128]{1,0:T(8,128)}', space=vmem, size = 0x1000, scoped, tag = 'scratch operand']
  %s0 = inlined_call_operand.vmem [shape: bf16[8,128], index: 0, kind: input, shape index: {}]
  %s1 = inlined_call_operand.hbm [shape: bf16[128,128], index: 1, kind: input, shape index: {}]
  %s2 = inlined_call_operand.hbm [shape: f32[1,128], index: 2, kind: input, shape index: {}]
  %s3 = inlined_call_operand.hbm [shape: f32[1,128], index: 3, kind: input, shape index: {}]
  %s4 = inlined_call_operand.vmem [shape: bf16[8,128], index: 4, kind: output, shape index: {}]
  %s5 = sld [smem:[#allocation0]]
  $region46: #{mlp_apply.2} parent=0
    _
  %s7 = ssub.s32 1, %s5
  %s8 = scalar_select 0, %s7, %s5
  $region1: #{mlp_apply.2} parent=0
    #allocation3 [shape = 'u8[32768]{0}', space=vmem, size = 0x8000, scoped, tag = 'input window, operand 1, single buffered']
    #allocation4 [shape = 's32[1]{0}', space=sflag, size = 0x4, scoped, tag = 'scoped memory for mlp_apply.2']
    #allocation5 [shape = 'u8[512]{0}', space=vmem, size = 0x400, scoped, tag = 'input window, operand 2, single buffered']
    #allocation6 [shape = 's32[1]{0}', space=sflag, size = 0x4, scoped, tag = 'scoped memory for mlp_apply.2']
    #allocation7 [shape = 'u8[512]{0}', space=vmem, size = 0x400, scoped, tag = 'input window, operand 3, single buffered']
    %9 = vsyncpa [#allocation4], 0
    %10 = vsyncpa [#allocation6], 0
    // Predicated region
    $region2: #{mlp_apply.2} parent=1 // pred_check
      _
    $region3: #{mlp_apply.2} parent=1 // pred_check_branch
      %12 = sbr.rel (0) target = $region5
    $region4: #{mlp_apply.2} parent=1 // pred_region
      _
    $region5: #{mlp_apply.2} parent=1 // pred_fallthru
      _
    // Predicated region
    $region6: #{mlp_apply.2} parent=1 // pred_check
      _
    $region7: #{mlp_apply.2} parent=1 // pred_check_branch
      %14 = sbr.rel (0) target = $region9
    $region8: #{mlp_apply.2} parent=1 // pred_region
      %s16 = ssub.s32 1024, 1024
      %17 = vsyncadd [#allocation4], %s16
      %s18 = sshll.u32 [#allocation3], 4
      %s19 = int_to_ptr.vmem [resolvable:$true] %s18
      %24 = dma.hbm_to_vmem [thread:$0]  %s1, 1024, %s19, [#allocation4], 64, 64, 4
    $region9: #{mlp_apply.2} parent=1 // pred_fallthru
      _
    // Predicated region
    $region10: #{mlp_apply.2} parent=1 // pred_check
      _
    $region11: #{mlp_apply.2} parent=1 // pred_check_branch
      %26 = sbr.rel (0) target = $region13
    $region12: #{mlp_apply.2} parent=1 // pred_region
      %s28 = ssub.s32 16, 16
      %29 = vsyncadd [#allocation6], %s28
      %s31 = sshll.u32 [#allocation5], 4
      %s32 = int_to_ptr.vmem [resolvable:$true] %s31
      %34 = dma.hbm_to_vmem [thread:$0]  %s2, 16, %s32, [#allocation6]
    $region13: #{mlp_apply.2} parent=1 // pred_fallthru
      _
    // Predicated region
    $region14: #{mlp_apply.2} parent=1 // pred_check
      _
    $region15: #{mlp_apply.2} parent=1 // pred_check_branch
      %36 = sbr.rel (0) target = $region17
    $region16: #{mlp_apply.2} parent=1 // pred_region
      %s38 = ssub.s32 16, 16
      %39 = vsyncadd [#allocation6], %s38
      %s41 = sshll.u32 [#allocation7], 4
      %s42 = int_to_ptr.vmem [resolvable:$true] %s41
      %44 = dma.hbm_to_vmem [thread:$0]  %s3, 16, %s42, [#allocation6]
    $region17: #{mlp_apply.2} parent=1 // pred_fallthru
      _
    // Predicated region
    $region18: #{mlp_apply.2} parent=1 // pred_check
      _
    $region19: #{mlp_apply.2} parent=1 // pred_check_branch
      %46 = sbr.rel (0) target = $region21
    $region20: #{mlp_apply.2} parent=1 // pred_region
      %47 = dma.done [#allocation4], 1024
    $region21: #{mlp_apply.2} parent=1 // pred_fallthru
      _
    // Predicated region
    $region22: #{mlp_apply.2} parent=1 // pred_check
      _
    $region23: #{mlp_apply.2} parent=1 // pred_check_branch
      %49 = sbr.rel (0) target = $region25
    $region24: #{mlp_apply.2} parent=1 // pred_region
      %50 = dma.done [#allocation6], 16
    $region25: #{mlp_apply.2} parent=1 // pred_fallthru
      _
    // Predicated region
    $region26: #{mlp_apply.2} parent=1 // pred_check
      _
    $region27: #{mlp_apply.2} parent=1 // pred_check_branch
      %52 = sbr.rel (0) target = $region29
    $region28: #{mlp_apply.2} parent=1 // pred_region
      %53 = dma.done [#allocation6], 16
    $region29: #{mlp_apply.2} parent=1 // pred_fallthru
      _
    %p55 = scmp.eq.s32.totalorder 0, 0
    // Predicated region
    $region30: #{mlp_apply.2} parent=1 // pred_check
      %p56 = pneg %p55
    $region31: #{mlp_apply.2} parent=1 // pred_check_branch
      %58 = sbr.rel (%p56) target = $region33
    $region32: #{mlp_apply.2} parent=1 // pred_region
      %59 = vst [vmem:[#allocation2] sm:$0xff] 0.0
    $region33: #{mlp_apply.2} parent=1 // pred_fallthru
      _
    %v60 = vld [vmem:[#allocation2] sm:$0xff]
    %v61 = vld [vmem:[%s0] sm:$0xf]
    %v62 = vld [vmem:[#allocation3] sm:$0xf]
    %v63 = vld [vmem:[#allocation3 + $0x4] sm:$0xf]
    %v64 = vld [vmem:[#allocation3 + $0x8] sm:$0xf]
    %v65 = vld [vmem:[#allocation3 + $0xc] sm:$0xf]
    %v66 = vld [vmem:[#allocation3 + $0x10] sm:$0xf]
    %v67 = vld [vmem:[#allocation3 + $0x14] sm:$0xf]
    %v68 = vld [vmem:[#allocation3 + $0x18] sm:$0xf]
    %v69 = vld [vmem:[#allocation3 + $0x1c] sm:$0xf]
    %v70 = vld [vmem:[#allocation3 + $0x20] sm:$0xf]
    %v71 = vld [vmem:[#allocation3 + $0x24] sm:$0xf]
    %v72 = vld [vmem:[#allocation3 + $0x28] sm:$0xf]
    %v73 = vld [vmem:[#allocation3 + $0x2c] sm:$0xf]
    %v74 = vld [vmem:[#allocation3 + $0x30] sm:$0xf]
    %v75 = vld [vmem:[#allocation3 + $0x34] sm:$0xf]
    %v76 = vld [vmem:[#allocation3 + $0x38] sm:$0xf]
    %v77 = vld [vmem:[#allocation3 + $0x3c] sm:$0xf]
    %v94 = vunpack.c.l.b16 %v62
    %v95 = vunpack.c.l.b16 %v63
    %v96 = vunpack.c.l.b16 %v64
    %v97 = vunpack.c.l.b16 %v65
    %v98 = vunpack.c.l.b16 %v66
    %v99 = vunpack.c.l.b16 %v67
    %v100 = vunpack.c.l.b16 %v68
    %v101 = vunpack.c.l.b16 %v69
    %v102 = vunpack.c.l.b16 %v70
    %v103 = vunpack.c.l.b16 %v71
    %v104 = vunpack.c.l.b16 %v72
    %v105 = vunpack.c.l.b16 %v73
    %v106 = vunpack.c.l.b16 %v74
    %v107 = vunpack.c.l.b16 %v75
    %v108 = vunpack.c.l.b16 %v76
    %v109 = vunpack.c.l.b16 %v77
    %v110 = vpack.c.b16 %v95, %v94
    %v111 = vpack.c.b16 %v97, %v96
    %v112 = vpack.c.b16 %v99, %v98
    %v113 = vpack.c.b16 %v101, %v100
    %v114 = vpack.c.b16 %v103, %v102
    %v115 = vpack.c.b16 %v105, %v104
    %v116 = vpack.c.b16 %v107, %v106
    %v117 = vpack.c.b16 %v109, %v108
    %126 = vmatprep.subr.bf16.mxu0 0
    %127 = vmatpush1.bf16.msra.mxu0 %v110
    %128 = vmatprep.subr.bf16.mxu0 0
    %129 = vmatpush1.bf16.msra.mxu0 %v111
    %130 = vmatprep.subr.bf16.mxu0 0
    %131 = vmatpush1.bf16.msra.mxu0 %v112
    %132 = vmatprep.subr.bf16.mxu0 0
    %133 = vmatpush1.bf16.msra.mxu0 %v113
    %134 = vmatprep.subr.bf16.mxu0 0
    %135 = vmatpush1.bf16.msra.mxu0 %v114
    %136 = vmatprep.subr.bf16.mxu0 0
    %137 = vmatpush1.bf16.msra.mxu0 %v115
    %138 = vmatprep.subr.bf16.mxu0 0
    %139 = vmatpush1.bf16.msra.mxu0 %v116
    %140 = vmatprep.subr.bf16.mxu0 0
    %141 = vmatpush1.bf16.msra.mxu0 %v117
    %142 = vmatprep.subr.bf16.mxu0 0
    %143 = vmatpush1.bf16.msra.mxu0 0
    %144 = vmatprep.subr.bf16.mxu0 0
    %145 = vmatpush1.bf16.msra.mxu0 0
    %146 = vmatprep.subr.bf16.mxu0 0
    %147 = vmatpush1.bf16.msra.mxu0 0
    %148 = vmatprep.subr.bf16.mxu0 0
    %149 = vmatpush1.bf16.msra.mxu0 0
    %150 = vmatprep.subr.bf16.mxu0 0
    %151 = vmatpush1.bf16.msra.mxu0 0
    %152 = vmatprep.subr.bf16.mxu0 0
    %153 = vmatpush1.bf16.msra.mxu0 0
    %154 = vmatprep.subr.bf16.mxu0 0
    %155 = vmatpush1.bf16.msra.mxu0 0
    %156 = vmatprep.subr.bf16.mxu0 0
    %157 = vmatpush1.bf16.msra.mxu0 0
    %158 = vmatprep.mubr.bf16.mxu0 0
    %159 = vmatmul.mubr.bf16.gmra.mrb[0].mxu0 %v61
    %v160 = vpop.f32.mrb[0].mxu0
    %v161 = vadd.f32 0.0, %v160
    %v162 = vpop.f32.mrb[0].mxu0
    %v163 = vpop.f32.mrb[0].mxu0
    %v164 = vpop.f32.mrb[0].mxu0
    %165 = vdwg.mxu0
    %v166 = vadd.f32 %v60, %v161
    %167 = vst [vmem:[#allocation2] sm:$0xff] %v166
    // Predicated region
    $region34: #{mlp_apply.2} parent=1 // pred_check
      %p168 = pneg %p55
    $region35: #{mlp_apply.2} parent=1 // pred_check_branch
      %170 = sbr.rel (%p168) target = $region37
    $region36: #{mlp_apply.2} parent=1 // pred_region
      %v171 = vld [vmem:[#allocation2] sm:$0xff]
      %v172 = vrot.slane %v171, 4
      %v173 = vadd.f32 %v171, %v172
      %v174 = vrot.slane %v173, 2
      %v175 = vadd.f32 %v173, %v174
      %v176 = vrot.slane %v175, 1
      %v177 = vadd.f32 %v175, %v176
      %v178 = vmul.f32 %v177, 0.125
      %v179 = vmul.f32 %v171, %v171
      %v180 = vrot.slane %v179, 4
      %v181 = vadd.f32 %v179, %v180
      %v182 = vrot.slane %v181, 2
      %v183 = vadd.f32 %v181, %v182
      %v184 = vrot.slane %v183, 1
      %v185 = vadd.f32 %v183, %v184
      %v186 = vmul.f32 %v185, 0.125
      %v187 = vmul.f32 %v178, %v178
      %v188 = vsub.f32 %v186, %v187
      %v189 = vadd.f32 %v188, 1e-05
      %v190 = vrsqrt.pop %v189
      %v191 = vsub.f32 %v171, %v178
      %v192 = vmul.f32 %v191, %v190
      %v193 = vld [vmem:[#allocation5] sm:$0x1]
      %v195 = vlaneseq
      %v196 = vshrl.u32 %v195, 7
      %v197 = vsub.s32 0, %v196
      %v198 = vrot.slane %v193, %v197
      %v200 = vmul.f32 %v192, %v198
      %v201 = vld [vmem:[#allocation7] sm:$0x1]
      %v203 = vlaneseq
      %v204 = vshrl.u32 %v203, 7
      %v205 = vsub.s32 0, %v204
      %v206 = vrot.slane %v201, %v205
      %v208 = vadd.f32 %v200, %v206
      %v209 = vmax.f32 %v208, 0.0
      %v210 = vpack.c.bf16 %v209, %v209
      %211 = vst [vmem:[%s4] sm:$0xf] %v210
    $region37: #{mlp_apply.2} parent=1 // pred_fallthru
      _
    // Predicated region
    $region38: #{mlp_apply.2} parent=1 // pred_check
      _
    $region39: #{mlp_apply.2} parent=1 // pred_check_branch
      %213 = sbr.rel (0) target = $region41
    $region40: #{mlp_apply.2} parent=1 // pred_region
      _
    $region41: #{mlp_apply.2} parent=1 // pred_fallthru
      _
    // Predicated region
    $region42: #{mlp_apply.2} parent=1 // pred_check
      _
    $region43: #{mlp_apply.2} parent=1 // pred_check_branch
      %215 = sbr.rel (0) target = $region45
    $region44: #{mlp_apply.2} parent=1 // pred_region
      _
    $region45: #{mlp_apply.2} parent=1 // pred_fallthru
      _
    %216 = vsyncpa [#allocation4], 1
    %217 = vsyncpa [#allocation6], 1

// kernel: mlp_apply.3
$region0: #{mlp_apply.3}
  #allocation0 [shape = 'u32[]', space=smem, size = 0x4, offset = 0x4, fixed_abs, tag = 'smem constant byte address 0x4 - core index']
  #allocation1 [shape = 'u32[144,128]{1,0:T(1,128)}', space=vmem, size = 0x12000, scoped, tag = 'internal scratch']
  #allocation2 [shape = 'f32[8,128]{1,0:T(8,128)}', space=vmem, size = 0x1000, scoped, tag = 'scratch operand']
  %s0 = inlined_call_operand.vmem [shape: bf16[8,128], index: 0, kind: input, shape index: {}]
  %s1 = inlined_call_operand.vmem [shape: bf16[128,128], index: 1, kind: input, shape index: {}]
  %s2 = inlined_call_operand.vmem [shape: f32[1,128], index: 2, kind: input, shape index: {}]
  %s3 = inlined_call_operand.vmem [shape: f32[1,128], index: 3, kind: input, shape index: {}]
  %s4 = inlined_call_operand.hbm [shape: bf16[128,128], index: 4, kind: input, shape index: {}]
  %s5 = inlined_call_operand.vmem [shape: f32[1,8,128], index: 5, kind: output, shape index: {}]
  %s6 = sld [smem:[#allocation0]]
  $region42: #{mlp_apply.3} parent=0
    _
  %s8 = ssub.s32 1, %s6
  %s9 = scalar_select 0, %s8, %s6
  $region1: #{mlp_apply.3} parent=0
    #allocation3 [shape = 'u8[32768]{0}', space=vmem, size = 0x8000, scoped, tag = 'input window, operand 4, single buffered']
    #allocation4 [shape = 's32[1]{0}', space=sflag, size = 0x4, scoped, tag = 'scoped memory for mlp_apply.3']
    %10 = vsyncpa [#allocation4], 0
    // Predicated region
    $region2: #{mlp_apply.3} parent=1 // pred_check
      _
    $region3: #{mlp_apply.3} parent=1 // pred_check_branch
      %12 = sbr.rel (0) target = $region5
    $region4: #{mlp_apply.3} parent=1 // pred_region
      _
    $region5: #{mlp_apply.3} parent=1 // pred_fallthru
      _
    // Predicated region
    $region6: #{mlp_apply.3} parent=1 // pred_check
      _
    $region7: #{mlp_apply.3} parent=1 // pred_check_branch
      %14 = sbr.rel (0) target = $region9
    $region8: #{mlp_apply.3} parent=1 // pred_region
      _
    $region9: #{mlp_apply.3} parent=1 // pred_fallthru
      _
    // Predicated region
    $region10: #{mlp_apply.3} parent=1 // pred_check
      _
    $region11: #{mlp_apply.3} parent=1 // pred_check_branch
      %16 = sbr.rel (0) target = $region13
    $region12: #{mlp_apply.3} parent=1 // pred_region
      _
    $region13: #{mlp_apply.3} parent=1 // pred_fallthru
      _
    // Predicated region
    $region14: #{mlp_apply.3} parent=1 // pred_check
      _
    $region15: #{mlp_apply.3} parent=1 // pred_check_branch
      %18 = sbr.rel (0) target = $region17
    $region16: #{mlp_apply.3} parent=1 // pred_region
      _
    $region17: #{mlp_apply.3} parent=1 // pred_fallthru
      _
    // Predicated region
    $region18: #{mlp_apply.3} parent=1 // pred_check
      _
    $region19: #{mlp_apply.3} parent=1 // pred_check_branch
      %20 = sbr.rel (0) target = $region21
    $region20: #{mlp_apply.3} parent=1 // pred_region
      %s22 = ssub.s32 1024, 1024
      %23 = vsyncadd [#allocation4], %s22
      %s24 = sshll.u32 [#allocation3], 4
      %s25 = int_to_ptr.vmem [resolvable:$true] %s24
      %30 = dma.hbm_to_vmem [thread:$0]  %s4, 1024, %s25, [#allocation4], 64, 64, 4
    $region21: #{mlp_apply.3} parent=1 // pred_fallthru
      _
    // Predicated region
    $region22: #{mlp_apply.3} parent=1 // pred_check
      _
    $region23: #{mlp_apply.3} parent=1 // pred_check_branch
      %32 = sbr.rel (0) target = $region25
    $region24: #{mlp_apply.3} parent=1 // pred_region
      %33 = dma.done [#allocation4], 1024
    $region25: #{mlp_apply.3} parent=1 // pred_fallthru
      _
    %p35 = scmp.eq.s32.totalorder 0, 0
    // Predicated region
    $region26: #{mlp_apply.3} parent=1 // pred_check
      %p36 = pneg %p35
    $region27: #{mlp_apply.3} parent=1 // pred_check_branch
      %38 = sbr.rel (%p36) target = $region29
    $region28: #{mlp_apply.3} parent=1 // pred_region
      %39 = vst [vmem:[#allocation2] sm:$0xff] 0.0
    $region29: #{mlp_apply.3} parent=1 // pred_fallthru
      _
    %v40 = vld [vmem:[#allocation2] sm:$0xff]
    %v41 = vld [vmem:[%s0] sm:$0xf]
    %v42 = vld [vmem:[%s1] sm:$0xf]
    %v43 = vld [vmem:[%s1 + $0x4] sm:$0xf]
    %v44 = vld [vmem:[%s1 + $0x8] sm:$0xf]
    %v45 = vld [vmem:[%s1 + $0xc] sm:$0xf]
    %v46 = vld [vmem:[%s1 + $0x10] sm:$0xf]
    %v47 = vld [vmem:[%s1 + $0x14] sm:$0xf]
    %v48 = vld [vmem:[%s1 + $0x18] sm:$0xf]
    %v49 = vld [vmem:[%s1 + $0x1c] sm:$0xf]
    %v50 = vld [vmem:[%s1 + $0x20] sm:$0xf]
    %v51 = vld [vmem:[%s1 + $0x24] sm:$0xf]
    %v52 = vld [vmem:[%s1 + $0x28] sm:$0xf]
    %v53 = vld [vmem:[%s1 + $0x2c] sm:$0xf]
    %v54 = vld [vmem:[%s1 + $0x30] sm:$0xf]
    %v55 = vld [vmem:[%s1 + $0x34] sm:$0xf]
    %v56 = vld [vmem:[%s1 + $0x38] sm:$0xf]
    %v57 = vld [vmem:[%s1 + $0x3c] sm:$0xf]
    %v74 = vunpack.c.l.b16 %v42
    %v75 = vunpack.c.l.b16 %v43
    %v76 = vunpack.c.l.b16 %v44
    %v77 = vunpack.c.l.b16 %v45
    %v78 = vunpack.c.l.b16 %v46
    %v79 = vunpack.c.l.b16 %v47
    %v80 = vunpack.c.l.b16 %v48
    %v81 = vunpack.c.l.b16 %v49
    %v82 = vunpack.c.l.b16 %v50
    %v83 = vunpack.c.l.b16 %v51
    %v84 = vunpack.c.l.b16 %v52
    %v85 = vunpack.c.l.b16 %v53
    %v86 = vunpack.c.l.b16 %v54
    %v87 = vunpack.c.l.b16 %v55
    %v88 = vunpack.c.l.b16 %v56
    %v89 = vunpack.c.l.b16 %v57
    %v90 = vpack.c.b16 %v75, %v74
    %v91 = vpack.c.b16 %v77, %v76
    %v92 = vpack.c.b16 %v79, %v78
    %v93 = vpack.c.b16 %v81, %v80
    %v94 = vpack.c.b16 %v83, %v82
    %v95 = vpack.c.b16 %v85, %v84
    %v96 = vpack.c.b16 %v87, %v86
    %v97 = vpack.c.b16 %v89, %v88
    %106 = vmatprep.subr.bf16.mxu0 0
    %107 = vmatpush1.bf16.msra.mxu0 %v90
    %108 = vmatprep.subr.bf16.mxu0 0
    %109 = vmatpush1.bf16.msra.mxu0 %v91
    %110 = vmatprep.subr.bf16.mxu0 0
    %111 = vmatpush1.bf16.msra.mxu0 %v92
    %112 = vmatprep.subr.bf16.mxu0 0
    %113 = vmatpush1.bf16.msra.mxu0 %v93
    %114 = vmatprep.subr.bf16.mxu0 0
    %115 = vmatpush1.bf16.msra.mxu0 %v94
    %116 = vmatprep.subr.bf16.mxu0 0
    %117 = vmatpush1.bf16.msra.mxu0 %v95
    %118 = vmatprep.subr.bf16.mxu0 0
    %119 = vmatpush1.bf16.msra.mxu0 %v96
    %120 = vmatprep.subr.bf16.mxu0 0
    %121 = vmatpush1.bf16.msra.mxu0 %v97
    %122 = vmatprep.subr.bf16.mxu0 0
    %123 = vmatpush1.bf16.msra.mxu0 0
    %124 = vmatprep.subr.bf16.mxu0 0
    %125 = vmatpush1.bf16.msra.mxu0 0
    %126 = vmatprep.subr.bf16.mxu0 0
    %127 = vmatpush1.bf16.msra.mxu0 0
    %128 = vmatprep.subr.bf16.mxu0 0
    %129 = vmatpush1.bf16.msra.mxu0 0
    %130 = vmatprep.subr.bf16.mxu0 0
    %131 = vmatpush1.bf16.msra.mxu0 0
    %132 = vmatprep.subr.bf16.mxu0 0
    %133 = vmatpush1.bf16.msra.mxu0 0
    %134 = vmatprep.subr.bf16.mxu0 0
    %135 = vmatpush1.bf16.msra.mxu0 0
    %136 = vmatprep.subr.bf16.mxu0 0
    %137 = vmatpush1.bf16.msra.mxu0 0
    %138 = vmatprep.mubr.bf16.mxu0 0
    %139 = vmatmul.mubr.bf16.gmra.mrb[0].mxu0 %v41
    %v140 = vpop.f32.mrb[0].mxu0
    %v141 = vadd.f32 0.0, %v140
    %v142 = vpop.f32.mrb[0].mxu0
    %v143 = vpop.f32.mrb[0].mxu0
    %v144 = vpop.f32.mrb[0].mxu0
    %145 = vdwg.mxu0
    %v146 = vadd.f32 %v40, %v141
    %147 = vst [vmem:[#allocation2] sm:$0xff] %v146
    // Predicated region
    $region30: #{mlp_apply.3} parent=1 // pred_check
      %p148 = pneg %p35
    $region31: #{mlp_apply.3} parent=1 // pred_check_branch
      %150 = sbr.rel (%p148) target = $region33
    $region32: #{mlp_apply.3} parent=1 // pred_region
      %v151 = vld [vmem:[#allocation2] sm:$0xff]
      %v152 = vrot.slane %v151, 4
      %v153 = vadd.f32 %v151, %v152
      %v154 = vrot.slane %v153, 2
      %v155 = vadd.f32 %v153, %v154
      %v156 = vrot.slane %v155, 1
      %v157 = vadd.f32 %v155, %v156
      %v158 = vmul.f32 %v157, 0.125
      %v159 = vmul.f32 %v151, %v151
      %v160 = vrot.slane %v159, 4
      %v161 = vadd.f32 %v159, %v160
      %v162 = vrot.slane %v161, 2
      %v163 = vadd.f32 %v161, %v162
      %v164 = vrot.slane %v163, 1
      %v165 = vadd.f32 %v163, %v164
      %v166 = vmul.f32 %v165, 0.125
      %v167 = vmul.f32 %v158, %v158
      %v168 = vsub.f32 %v166, %v167
      %v169 = vadd.f32 %v168, 1e-05
      %v170 = vrsqrt.pop %v169
      %v171 = vsub.f32 %v151, %v158
      %v172 = vmul.f32 %v171, %v170
      %v173 = vld [vmem:[%s2] sm:$0x1]
      %v175 = vlaneseq
      %v176 = vshrl.u32 %v175, 7
      %v177 = vsub.s32 0, %v176
      %v178 = vrot.slane %v173, %v177
      %v180 = vmul.f32 %v172, %v178
      %v181 = vld [vmem:[%s3] sm:$0x1]
      %v183 = vlaneseq
      %v184 = vshrl.u32 %v183, 7
      %v185 = vsub.s32 0, %v184
      %v186 = vrot.slane %v181, %v185
      %v188 = vadd.f32 %v180, %v186
      %v189 = vmax.f32 %v188, 0.0
      %v190 = vpack.c.bf16 %v189, %v189
      %v191 = vld [vmem:[#allocation3] sm:$0xf]
      %v192 = vld [vmem:[#allocation3 + $0x4] sm:$0xf]
      %v193 = vld [vmem:[#allocation3 + $0x8] sm:$0xf]
      %v194 = vld [vmem:[#allocation3 + $0xc] sm:$0xf]
      %v195 = vld [vmem:[#allocation3 + $0x10] sm:$0xf]
      %v196 = vld [vmem:[#allocation3 + $0x14] sm:$0xf]
      %v197 = vld [vmem:[#allocation3 + $0x18] sm:$0xf]
      %v198 = vld [vmem:[#allocation3 + $0x1c] sm:$0xf]
      %v199 = vld [vmem:[#allocation3 + $0x20] sm:$0xf]
      %v200 = vld [vmem:[#allocation3 + $0x24] sm:$0xf]
      %v201 = vld [vmem:[#allocation3 + $0x28] sm:$0xf]
      %v202 = vld [vmem:[#allocation3 + $0x2c] sm:$0xf]
      %v203 = vld [vmem:[#allocation3 + $0x30] sm:$0xf]
      %v204 = vld [vmem:[#allocation3 + $0x34] sm:$0xf]
      %v205 = vld [vmem:[#allocation3 + $0x38] sm:$0xf]
      %v206 = vld [vmem:[#allocation3 + $0x3c] sm:$0xf]
      %v223 = vunpack.c.l.b16 %v191
      %v224 = vunpack.c.l.b16 %v192
      %v225 = vunpack.c.l.b16 %v193
      %v226 = vunpack.c.l.b16 %v194
      %v227 = vunpack.c.l.b16 %v195
      %v228 = vunpack.c.l.b16 %v196
      %v229 = vunpack.c.l.b16 %v197
      %v230 = vunpack.c.l.b16 %v198
      %v231 = vunpack.c.l.b16 %v199
      %v232 = vunpack.c.l.b16 %v200
      %v233 = vunpack.c.l.b16 %v201
      %v234 = vunpack.c.l.b16 %v202
      %v235 = vunpack.c.l.b16 %v203
      %v236 = vunpack.c.l.b16 %v204
      %v237 = vunpack.c.l.b16 %v205
      %v238 = vunpack.c.l.b16 %v206
      %v239 = vpack.c.b16 %v224, %v223
      %v240 = vpack.c.b16 %v226, %v225
      %v241 = vpack.c.b16 %v228, %v227
      %v242 = vpack.c.b16 %v230, %v229
      %v243 = vpack.c.b16 %v232, %v231
      %v244 = vpack.c.b16 %v234, %v233
      %v245 = vpack.c.b16 %v236, %v235
      %v246 = vpack.c.b16 %v238, %v237
      %255 = vmatprep.subr.bf16.mxu0 0
      %256 = vmatpush1.bf16.msra.mxu0 %v239
      %257 = vmatprep.subr.bf16.mxu0 0
      %258 = vmatpush1.bf16.msra.mxu0 %v240
      %259 = vmatprep.subr.bf16.mxu0 0
      %260 = vmatpush1.bf16.msra.mxu0 %v241
      %261 = vmatprep.subr.bf16.mxu0 0
      %262 = vmatpush1.bf16.msra.mxu0 %v242
      %263 = vmatprep.subr.bf16.mxu0 0
      %264 = vmatpush1.bf16.msra.mxu0 %v243
      %265 = vmatprep.subr.bf16.mxu0 0
      %266 = vmatpush1.bf16.msra.mxu0 %v244
      %267 = vmatprep.subr.bf16.mxu0 0
      %268 = vmatpush1.bf16.msra.mxu0 %v245
      %269 = vmatprep.subr.bf16.mxu0 0
      %270 = vmatpush1.bf16.msra.mxu0 %v246
      %271 = vmatprep.subr.bf16.mxu0 0
      %272 = vmatpush1.bf16.msra.mxu0 0
      %273 = vmatprep.subr.bf16.mxu0 0
      %274 = vmatpush1.bf16.msra.mxu0 0
      %275 = vmatprep.subr.bf16.mxu0 0
      %276 = vmatpush1.bf16.msra.mxu0 0
      %277 = vmatprep.subr.bf16.mxu0 0
      %278 = vmatpush1.bf16.msra.mxu0 0
      %279 = vmatprep.subr.bf16.mxu0 0
      %280 = vmatpush1.bf16.msra.mxu0 0
      %281 = vmatprep.subr.bf16.mxu0 0
      %282 = vmatpush1.bf16.msra.mxu0 0
      %283 = vmatprep.subr.bf16.mxu0 0
      %284 = vmatpush1.bf16.msra.mxu0 0
      %285 = vmatprep.subr.bf16.mxu0 0
      %286 = vmatpush1.bf16.msra.mxu0 0
      %287 = vmatprep.mubr.bf16.mxu0 0
      %288 = vmatmul.mubr.bf16.gmra.mrb[0].mxu0 %v190
      %v289 = vpop.f32.mrb[0].mxu0
      %v290 = vadd.f32 0.0, %v289
      %v291 = vpop.f32.mrb[0].mxu0
      %v292 = vpop.f32.mrb[0].mxu0
      %v293 = vpop.f32.mrb[0].mxu0
      %294 = vdwg.mxu0
      %295 = vst [vmem:[%s5] sm:$0xff] %v290
    $region33: #{mlp_apply.3} parent=1 // pred_fallthru
      _
    // Predicated region
    $region34: #{mlp_apply.3} parent=1 // pred_check
      _
    $region35: #{mlp_apply.3} parent=1 // pred_check_branch
      %297 = sbr.rel (0) target = $region37
    $region36: #{mlp_apply.3} parent=1 // pred_region
      _
    $region37: #{mlp_apply.3} parent=1 // pred_fallthru
      _
    // Predicated region
    $region38: #{mlp_apply.3} parent=1 // pred_check
      _
    $region39: #{mlp_apply.3} parent=1 // pred_check_branch
      %299 = sbr.rel (0) target = $region41
    $region40: #{mlp_apply.3} parent=1 // pred_region
      _
    $region41: #{mlp_apply.3} parent=1 // pred_fallthru
      _
    %300 = vsyncpa [#allocation4], 1

</llo_original>
